<compile_context>
chip_gen: v5e
topology: v5e:2x2
jax: 0.10.0
libtpu: 0.0.40
codegen_flags: <defaults>
</compile_context>

<pallas_src>
import functools

import jax
import jax.numpy as jnp
from jax.experimental import pallas as pl
from jax.experimental.pallas import tpu as pltpu


def _round_up(v, m):
    return ((v + m - 1) // m) * m


def _cdiv(a, b):
    return (a + b - 1) // b


# --------------------------------------------------------------------------- #
# Kernels
# --------------------------------------------------------------------------- #
def _fused_head_kernel(x_ref, w_ref, b_ref, out_ref):
    """Single-pass: one (TILE_N, D) x (D, C_pad) bf16 matmul + f32 bias add."""
    acc = jnp.dot(x_ref[...].astype(w_ref.dtype), w_ref[...],
                  preferred_element_type=jnp.float32)
    out_ref[...] = (acc + b_ref[...]).astype(out_ref.dtype)


def _fused_head_kernel_ktiled(x_ref, w_ref, b_ref, out_ref, acc_ref):
    """K-tiled: accumulate (TILE_N, TK) x (TK, C_pad) into an f32 VMEM scratch."""
    k = pl.program_id(1)

    @pl.when(k == 0)
    def _():
        acc_ref[...] = jnp.zeros_like(acc_ref)

    acc_ref[...] += jnp.dot(x_ref[...].astype(w_ref.dtype), w_ref[...],
                            preferred_element_type=jnp.float32)

    @pl.when(k == pl.num_programs(1) - 1)
    def _():
        out_ref[...] = (acc_ref[...] + b_ref[...]).astype(out_ref.dtype)


# --------------------------------------------------------------------------- #
# One-time parameter fusion (outside jit)
# --------------------------------------------------------------------------- #
def prepare_fused_params(w_cls, b_cls, w_box, b_box, weight_dtype=jnp.bfloat16):
    """Fuse + transpose + lane-pad + cast the two Linear heads ONCE.

    Returns (w_fused (D, C_pad) bf16, b_fused (1, C_pad) f32, c1, c2) where
    columns [0:c1] are cls_score and [c1:c1+c2] are bbox_pred (rest = zero pad).
    The bias stays f32: it is only C_pad elements and keeps the epilogue exact.
    """
    c1, d = w_cls.shape
    c2 = w_box.shape[0]
    c_pad = _round_up(c1 + c2, 128)

    w_fused = jnp.zeros((d, c_pad), dtype=jnp.float32)
    w_fused = w_fused.at[:, :c1].set(w_cls.T)
    w_fused = w_fused.at[:, c1:c1 + c2].set(w_box.T)
    w_fused = w_fused.astype(weight_dtype)

    b_fused = jnp.zeros((1, c_pad), dtype=jnp.float32)
    b_fused = b_fused.at[0, :c1].set(b_cls)
    b_fused = b_fused.at[0, c1:c1 + c2].set(b_box)
    return w_fused, b_fused, c1, c2


# --------------------------------------------------------------------------- #
# Forward
# --------------------------------------------------------------------------- #
@functools.partial(
    jax.jit,
    static_argnames=("c1", "c2", "tile_n", "max_weight_block_bytes"))
def fast_rcnn_output_layers_forward(x, w_fused, b_fused, *, c1, c2,
                                    tile_n=256,
                                    max_weight_block_bytes=8 * 1024 * 1024):
    """Pallas-backed FastRCNNOutputLayers.forward.

    Args:
      x:        (N, C, H, W) or (N, D) ROI features (f32 or bf16).
      w_fused:  (D, C_pad) fused/transposed/padded bf16 weights.
      b_fused:  (1, C_pad) fused f32 bias row.
      c1, c2:   true output widths (num_classes+1, num_bbox_reg_classes*box_dim).
      tile_n:   max proposal-tile rows (256 fills v6e/v7x's 256x256 MXU; 128 is
                already MXU-friendly on v5e).
      max_weight_block_bytes: per-step weight-block budget; above this, D is
                K-tiled with an accumulator.
    Returns:
      (scores (N, c1) f32, proposal_deltas (N, c2) f32)
    """
    if x.ndim > 2:
        x = x.reshape(x.shape[0], -1)          # torch.flatten(x, start_dim=1)
    n, d = x.shape
    c_pad = w_fused.shape[1]

    if n == 0:  # no proposals: degenerate case, skip the kernel entirely
        return (jnp.zeros((0, c1), jnp.float32),
                jnp.zeros((0, c2), jnp.float32))

    # ---- choose an N tile ---------------------------------------------------
    tile_n = max(8, min(int(tile_n), _round_up(n, 8)))
    n_steps = _cdiv(n, tile_n)
    if n_steps == 1 and n >= 256:
        n_steps = 2                           # keep both v7x TCs busy
    tile_n = _round_up(_cdiv(n, n_steps), 8)  # balance tiles -> small tail waste
    n_steps = _cdiv(n, tile_n)

    # ---- choose a K tile ----------------------------------------------------
    w_itemsize = jnp.dtype(w_fused.dtype).itemsize
    tk = d
    if d * c_pad * w_itemsize > max_weight_block_bytes:
        # Largest multiple-of-128 divisor of d whose weight block fits budget
        # (tk must divide d exactly so no junk columns leak into the accumulator).
        best = None
        cand = 128
        while cand <= d:
            if d % cand == 0 and cand * c_pad * w_itemsize <= max_weight_block_bytes:
                best = cand
            cand += 128
        if best is not None:
            tk = best
        # else: no clean divisor -> fall back to single pass (correctness first)
    k_steps = d // tk

    # ---- explicit VMEM budget (conservative: assume 2 buffers everywhere) ---
    x_itemsize = jnp.dtype(x.dtype).itemsize
    needed = (2 * tile_n * tk * x_itemsize          # x tiles
              + 2 * tk * c_pad * w_itemsize         # weight tiles
              + 2 * c_pad * 4                       # bias
              + 2 * tile_n * c_pad * 4              # output tiles
              + (tile_n * c_pad * 4 if k_steps > 1 else 0))  # accumulator
    vmem_limit = int(max(needed * 1.25, 16 * 2 ** 20))

    out_shape = jax.ShapeDtypeStruct((n, c_pad), jnp.float32)

    if k_steps == 1:
        out = pl.pallas_call(
            _fused_head_kernel,
            out_shape=out_shape,
            grid=(n_steps,),
            in_specs=[
                # x: tiled over proposals, double-buffered / pipelined
                pl.BlockSpec((tile_n, d), lambda i: (i, 0)),
                # fused weight / bias: constant index -> VMEM-resident,
                # single-buffered (no point double-buffering a block that is
                # never re-fetched)
                pl.BlockSpec((d, c_pad), lambda i: (0, 0),
                             pipeline_mode=pl.Buffered(1)),
                pl.BlockSpec((1, c_pad), lambda i: (0, 0),
                             pipeline_mode=pl.Buffered(1)),
            ],
            out_specs=pl.BlockSpec((tile_n, c_pad), lambda i: (i, 0)),
            compiler_params=pltpu.CompilerParams(
                dimension_semantics=("parallel",),
                vmem_limit_bytes=vmem_limit),
        )(x, w_fused, b_fused)
    else:
        out = pl.pallas_call(
            _fused_head_kernel_ktiled,
            out_shape=out_shape,
            grid=(n_steps, k_steps),
            in_specs=[
                pl.BlockSpec((tile_n, tk), lambda i, k: (i, k)),
                pl.BlockSpec((tk, c_pad), lambda i, k: (k, 0)),
                pl.BlockSpec((1, c_pad), lambda i, k: (0, 0),
                             pipeline_mode=pl.Buffered(1)),
            ],
            out_specs=pl.BlockSpec((tile_n, c_pad), lambda i, k: (i, 0)),
            scratch_shapes=[pltpu.VMEM((tile_n, c_pad), jnp.float32)],
            compiler_params=pltpu.CompilerParams(
                dimension_semantics=("parallel", "arbitrary"),
                vmem_limit_bytes=vmem_limit),
        )(x, w_fused, b_fused)

    scores = out[:, :c1]
    proposal_deltas = out[:, c1:c1 + c2]
    return scores, proposal_deltas


def init_params(key, input_size, num_classes, cls_agnostic_bbox_reg, box_dim=4):
    """Deterministic re-implementation of FastRCNNOutputLayers.__init__ init."""
    num_bbox_reg_classes = 1 if cls_agnostic_bbox_reg else num_classes
    k_cls, k_box = jax.random.split(key)
    w_cls = 0.01 * jax.random.normal(
        k_cls, (num_classes + 1, input_size), dtype=jnp.float32)
    b_cls = jnp.zeros((num_classes + 1,), dtype=jnp.float32)
    w_box = 0.001 * jax.random.normal(
        k_box, (num_bbox_reg_classes * box_dim, input_size), dtype=jnp.float32)
    b_box = jnp.zeros((num_bbox_reg_classes * box_dim,), dtype=jnp.float32)
    return w_cls, b_cls, w_box, b_box


if __name__ == "__main__":
    key = jax.random.PRNGKey(0)
    bf = lambda a: a.astype(jnp.bfloat16).astype(jnp.float32)

    # Config mirroring FastRCNNOutputLayers.from_config:
    #   num_classes=1, cls_agnostic_bbox_reg=True, box2box weights -> box_dim=4
    num_classes, cls_agnostic_bbox_reg, box_dim = 1, True, 4

    # ---------------- Test 1: small ROI features, single-pass path ----------
    N, C, H, W = 8, 4, 4, 4
    input_size = C * H * W
    k_x, k_params, k_x2, k_p2, k_b2 = jax.random.split(key, 5)
    x = jax.random.normal(k_x, (N, C, H, W), dtype=jnp.float32)
    w_cls, b_cls, w_box, b_box = init_params(
        k_params, input_size, num_classes, cls_agnostic_bbox_reg, box_dim)

    w_fused, b_fused, c1, c2 = prepare_fused_params(w_cls, b_cls, w_box, b_box)
    scores, deltas = fast_rcnn_output_layers_forward(
        x, w_fused, b_fused, c1=c1, c2=c2)
    jax.block_until_ready((scores, deltas))

    x_flat = x.reshape(N, -1)
    ref_scores = bf(x_flat) @ bf(w_cls).T + b_cls   # bf16-rounded operands
    ref_deltas = bf(x_flat) @ bf(w_box).T + b_box
    assert scores.shape == (N, num_classes + 1)
    assert deltas.shape == (N, box_dim)              # cls_agnostic -> 1 * box_dim
    assert jnp.allclose(scores, ref_scores, atol=2e-3, rtol=2e-3)
    assert jnp.allclose(deltas, ref_deltas, atol=2e-3, rtol=2e-3)
    # coarse sanity vs the pure-f32 reference
    assert jnp.allclose(scores, x_flat @ w_cls.T + b_cls, atol=5e-2, rtol=5e-2)

    # ---------------- Test 2: larger D -> K-tiled accumulator path ----------
    N2, D2 = 40, 1024
    x2 = jax.random.normal(k_x2, (N2, D2), dtype=jnp.float32)
    w_cls2, _, w_box2, _ = init_params(
        k_p2, D2, num_classes, cls_agnostic_bbox_reg, box_dim)
    b_cls2 = 0.1 * jax.random.normal(k_b2, (num_classes + 1,), dtype=jnp.float32)
    b_box2 = 0.1 * jax.random.normal(
        jax.random.fold_in(k_b2, 1), (box_dim,), dtype=jnp.float32)
    w_fused2, b_fused2, c1b, c2b = prepare_fused_params(
        w_cls2, b_cls2, w_box2, b_box2)
    # Tiny weight-block budget forces the K-tiled path (and ragged N blocks).
    scores2, deltas2 = fast_rcnn_output_layers_forward(
        x2, w_fused2, b_fused2, c1=c1b, c2=c2b,
        tile_n=32, max_weight_block_bytes=64 * 1024)
    jax.block_until_ready((scores2, deltas2))
    ref_scores2 = bf(x2) @ bf(w_cls2).T + b_cls2
    ref_deltas2 = bf(x2) @ bf(w_box2).T + b_box2
    assert scores2.shape == (N2, num_classes + 1)
    assert deltas2.shape == (N2, box_dim)
    assert jnp.allclose(scores2, ref_scores2, atol=2e-3, rtol=2e-3)
    assert jnp.allclose(deltas2, ref_deltas2, atol=2e-3, rtol=2e-3)

    # ---------------- Test 3: N == 0 (no proposals) guard --------------------
    s0, d0 = fast_rcnn_output_layers_forward(
        jnp.zeros((0, input_size), jnp.float32), w_fused, b_fused, c1=c1, c2=c2)
    assert s0.shape == (0, c1) and d0.shape == (0, c2)

    # TODO(synk): losses()/inference() (cross-entropy, smooth-L1, per-image NMS,
    # top-k) are data-dependent post-processing outside forward(); not
    # implemented as Pallas kernels here.
    print("KERNEL_OK")
</pallas_src>

<mosaic_0001>
module attributes {stable_mosaic.version = 11 : i64} {
  func.func @_fused_head_kernel(%arg0: i32, %arg1: memref<8x64xf32, #tpu.memory_space<vmem>>, %arg2: memref<64x128xbf16, #tpu.memory_space<vmem>>, %arg3: memref<1x128xf32, #tpu.memory_space<vmem>>, %arg4: memref<8x128xf32, #tpu.memory_space<vmem>>) attributes {dimension_semantics = [#tpu.dimension_semantics<parallel>], iteration_bounds = array<i64: 1>, scalar_prefetch = 0 : i64, scratch_operands = 0 : i64, tpu.core_type = #tpu.core_type<tc>, window_params = [{transform_indices = @transform_0, window_bounds = array<i64: 8, 64>}, {pipeline_mode = #tpu.pipeline_mode<synchronous>, transform_indices = @transform_1, window_bounds = array<i64: 64, 128>}, {pipeline_mode = #tpu.pipeline_mode<synchronous>, transform_indices = @transform_2, window_bounds = array<i64: 1, 128>}, {transform_indices = @transform_3, window_bounds = array<i64: 8, 128>}]} {
    %c0 = arith.constant 0 : index
    %c0_0 = arith.constant 0 : index
    %0 = vector.load %arg1[%c0, %c0_0] : memref<8x64xf32, #tpu.memory_space<vmem>>, vector<8x64xf32>
    %1 = arith.truncf %0 : vector<8x64xf32> to vector<8x64xbf16>
    %c0_1 = arith.constant 0 : index
    %c0_2 = arith.constant 0 : index
    %2 = vector.load %arg2[%c0_1, %c0_2] : memref<64x128xbf16, #tpu.memory_space<vmem>>, vector<64x128xbf16>
    %cst = arith.constant dense<0.000000e+00> : vector<8x128xf32>
    %3 = tpu.matmul %1, %2, %cst {dimension_numbers = #tpu.dot_dimension_numbers<[1], [0], [0], [1], [0, 0, 1, 1], [], []>} : vector<8x64xbf16>, vector<64x128xbf16>, vector<8x128xf32> -> vector<8x128xf32>
    %c0_3 = arith.constant 0 : index
    %c0_4 = arith.constant 0 : index
    %4 = vector.load %arg3[%c0_3, %c0_4] : memref<1x128xf32, #tpu.memory_space<vmem>>, vector<1x128xf32>
    %5 = vector.broadcast %4 : vector<1x128xf32> to vector<8x128xf32>
    %6 = arith.addf %3, %5 : vector<8x128xf32>
    %c0_5 = arith.constant 0 : index
    %c0_6 = arith.constant 0 : index
    %7 = vector.load %arg4[%c0_5, %c0_6] : memref<8x128xf32, #tpu.memory_space<vmem>>, vector<8x128xf32>
    tpu.vector_store %arg4[%c0_5, %c0_6], %6 {strides = array<i32>} : memref<8x128xf32, #tpu.memory_space<vmem>>, vector<8x128xf32>,
    return
  }
  func.func @transform_0(%arg0: i32) -> (i32, i32) {
    %c0_i32 = arith.constant 0 : i32
    %c0_i32_0 = arith.constant 0 : i32
    return %arg0, %c0_i32 : i32, i32
  }
  func.func @transform_1(%arg0: i32) -> (i32, i32) {
    %c0_i32 = arith.constant 0 : i32
    %c0_i32_0 = arith.constant 0 : i32
    %c0_i32_1 = arith.constant 0 : i32
    return %c0_i32, %c0_i32_0 : i32, i32
  }
  func.func @transform_2(%arg0: i32) -> (i32, i32) {
    %c0_i32 = arith.constant 0 : i32
    %c0_i32_0 = arith.constant 0 : i32
    %c0_i32_1 = arith.constant 0 : i32
    return %c0_i32, %c0_i32_0 : i32, i32
  }
  func.func @transform_3(%arg0: i32) -> (i32, i32) {
    %c0_i32 = arith.constant 0 : i32
    %c0_i32_0 = arith.constant 0 : i32
    return %arg0, %c0_i32 : i32, i32
  }
}

</mosaic_0001>

<llo_original>
// kernel: fast_rcnn_output_layers_forward.1
$region0: #{fast_rcnn_output_layers_forward.1}
  #allocation0 [shape = 'u32[]', space=smem, size = 0x4, offset = 0x4, fixed_abs, tag = 'smem constant byte address 0x4 - core index']
  #allocation1 [shape = 'u32[72,128]{1,0:T(1,128)}', space=vmem, size = 0x9000, scoped, tag = 'internal scratch']
  %s0 = inlined_call_operand.vmem [shape: f32[8,64], index: 0, kind: input, shape index: {}]
  %s1 = inlined_call_operand.vmem [shape: bf16[64,128], index: 1, kind: input, shape index: {}]
  %s2 = inlined_call_operand.vmem [shape: f32[1,128], index: 2, kind: input, shape index: {}]
  %s3 = inlined_call_operand.vmem [shape: f32[8,128], index: 3, kind: output, shape index: {}]
  %s4 = sld [smem:[#allocation0]]
  $region22: #{fast_rcnn_output_layers_forward.1} parent=0
    _
  %s6 = ssub.s32 1, %s4
  %s7 = scalar_select 0, %s6, %s4
  // Predicated region
  $region2: #{fast_rcnn_output_layers_forward.1} parent=0 // pred_check
    _
  $region3: #{fast_rcnn_output_layers_forward.1} parent=0 // pred_check_branch
    %9 = sbr.rel (0) target = $region5
  $region4: #{fast_rcnn_output_layers_forward.1} parent=0 // pred_region
    _
  $region5: #{fast_rcnn_output_layers_forward.1} parent=0 // pred_fallthru
    _
  // Predicated region
  $region6: #{fast_rcnn_output_layers_forward.1} parent=0 // pred_check
    _
  $region7: #{fast_rcnn_output_layers_forward.1} parent=0 // pred_check_branch
    %11 = sbr.rel (0) target = $region9
  $region8: #{fast_rcnn_output_layers_forward.1} parent=0 // pred_region
    _
  $region9: #{fast_rcnn_output_layers_forward.1} parent=0 // pred_fallthru
    _
  // Predicated region
  $region10: #{fast_rcnn_output_layers_forward.1} parent=0 // pred_check
    _
  $region11: #{fast_rcnn_output_layers_forward.1} parent=0 // pred_check_branch
    %13 = sbr.rel (0) target = $region13
  $region12: #{fast_rcnn_output_layers_forward.1} parent=0 // pred_region
    _
  $region13: #{fast_rcnn_output_layers_forward.1} parent=0 // pred_fallthru
    _
  %v15 = vld [vmem:[%s0] sm:$0xff]
  %v16 = vpack.c.bf16 %v15, %v15
  %v17 = vld [vmem:[%s1] sm:$0xf]
  %v18 = vld [vmem:[%s1 + $0x4] sm:$0xf]
  %v19 = vld [vmem:[%s1 + $0x8] sm:$0xf]
  %v20 = vld [vmem:[%s1 + $0xc] sm:$0xf]
  %v21 = vld [vmem:[%s1 + $0x10] sm:$0xf]
  %v22 = vld [vmem:[%s1 + $0x14] sm:$0xf]
  %v23 = vld [vmem:[%s1 + $0x18] sm:$0xf]
  %v24 = vld [vmem:[%s1 + $0x1c] sm:$0xf]
  %v25 = vld [vmem:[%s2] sm:$0x1]
  %v27 = vperm.slane %v25, 0
  %v37 = vunpack.c.l.b16 %v17
  %v38 = vunpack.c.l.b16 %v18
  %v39 = vunpack.c.l.b16 %v19
  %v40 = vunpack.c.l.b16 %v20
  %v41 = vunpack.c.l.b16 %v21
  %v42 = vunpack.c.l.b16 %v22
  %v43 = vunpack.c.l.b16 %v23
  %v44 = vunpack.c.l.b16 %v24
  %v45 = vpack.c.b16 %v38, %v37
  %v46 = vpack.c.b16 %v40, %v39
  %v47 = vpack.c.b16 %v42, %v41
  %v48 = vpack.c.b16 %v44, %v43
  %vm53 = vcmask 523264
  %v55 = vsel %vm53, %v16, 0
  %57 = vmatpush.bf16.msra.mxu0 0
  %58 = vmatpush.bf16.msra.mxu0 0
  %59 = vmatpush.bf16.msra.mxu0 0
  %60 = vmatpush.bf16.msra.mxu0 0
  %61 = vmatpush.bf16.msra.mxu0 %v48
  %62 = vmatpush.bf16.msra.mxu0 %v47
  %63 = vmatpush.bf16.msra.mxu0 %v46
  %64 = vmatpush.bf16.msra.mxu0 %v45
  %65 = vmatmul.bf16.gmra.mxu0 %v55
  %v66 = vpop.f32.mrf.mxu0
  %v67 = vadd.f32 %v27, %v66
  %v68 = vpop.f32.mrf.mxu0
  %69 = vdwg.mxu0
  %70 = vst [vmem:[%s3] sm:$0xff] %v67
  // Predicated region
  $region14: #{fast_rcnn_output_layers_forward.1} parent=0 // pred_check
    _
  $region15: #{fast_rcnn_output_layers_forward.1} parent=0 // pred_check_branch
    %72 = sbr.rel (0) target = $region17
  $region16: #{fast_rcnn_output_layers_forward.1} parent=0 // pred_region
    _
  $region17: #{fast_rcnn_output_layers_forward.1} parent=0 // pred_fallthru
    _
  // Predicated region
  $region18: #{fast_rcnn_output_layers_forward.1} parent=0 // pred_check
    _
  $region19: #{fast_rcnn_output_layers_forward.1} parent=0 // pred_check_branch
    %74 = sbr.rel (0) target = $region21
  $region20: #{fast_rcnn_output_layers_forward.1} parent=0 // pred_region
    _
  $region21: #{fast_rcnn_output_layers_forward.1} parent=0 // pred_fallthru
    _

</llo_original>
